<compile_context>
chip_gen: v6e
topology: v6e:2x2x1
jax: 0.10.0
libtpu: 0.0.40
codegen_flags: <defaults>
</compile_context>

<pallas_src>
import functools
import math

import jax
import jax.numpy as jnp
from jax import lax
from jax.experimental import pallas as pl
from jax.experimental.pallas import tpu as pltpu


_VMEM_LIMIT_BYTES = 64 * 1024 * 1024  # explicit budget; tiles below keep usage << this


def _tile(dim, target, align):
    """Largest multiple of `align` that divides `dim` and is <= target; else full `dim`."""
    if dim <= target:
        return dim
    t = (target // align) * align
    while t >= align:
        if dim % t == 0:
            return t
        t -= align
    return dim


# ---------------------------------------------------------------------------
# Tiled linear: o = act(x @ w + b)
# ---------------------------------------------------------------------------

def _linear_kernel(x_ref, w_ref, b_ref, o_ref, acc_ref, *, activation):
    @pl.when(pl.program_id(2) == 0)
    def _():
        acc_ref[...] = jnp.zeros_like(acc_ref)

    acc_ref[...] += jnp.dot(x_ref[...], w_ref[...],
                            preferred_element_type=jnp.float32)

    @pl.when(pl.program_id(2) == pl.num_programs(2) - 1)
    def _():
        acc = acc_ref[...] + b_ref[...].astype(jnp.float32)
        if activation == "gelu":
            acc = jax.nn.gelu(acc, approximate=False)   # HF BERT: exact (erf) gelu
        elif activation == "tanh":
            acc = jnp.tanh(acc)
        o_ref[...] = acc.astype(o_ref.dtype)


def linear(x, w, b, activation="none"):
    M, K = x.shape
    N = w.shape[1]
    tm = _tile(M, 512, 8)
    tn = _tile(N, 512, 128)
    tk = _tile(K, 512, 128)
    grid = (M // tm, N // tn, K // tk)
    return pl.pallas_call(
        functools.partial(_linear_kernel, activation=activation),
        out_shape=jax.ShapeDtypeStruct((M, N), x.dtype),
        grid_spec=pltpu.PrefetchScalarGridSpec(
            num_scalar_prefetch=0,
            grid=grid,
            in_specs=[
                pl.BlockSpec((tm, tk), lambda i, j, k: (i, k)),
                pl.BlockSpec((tk, tn), lambda i, j, k: (k, j)),
                pl.BlockSpec((1, tn), lambda i, j, k: (0, j)),
            ],
            out_specs=pl.BlockSpec((tm, tn), lambda i, j, k: (i, j)),
            scratch_shapes=[pltpu.VMEM((tm, tn), jnp.float32)],
        ),
        compiler_params=pltpu.CompilerParams(
            dimension_semantics=("parallel", "parallel", "arbitrary"),
            vmem_limit_bytes=_VMEM_LIMIT_BYTES,
        ),
    )(x, w, b.reshape(1, N))


# ---------------------------------------------------------------------------
# Tiled linear fused with residual add + LayerNorm epilogue:
#   o = LN((x @ w + b) + res) * gamma + beta        (LN over the full N axis)
# N is never tiled (needed whole for mean/var); M and K are tiled.
# The residual may be an (S, N) table broadcast over batch (embedding path).
# ---------------------------------------------------------------------------

def _linear_res_ln_kernel(x_ref, w_ref, b_ref, res_ref, g_ref, bt_ref,
                          o_ref, acc_ref, *, eps):
    @pl.when(pl.program_id(1) == 0)
    def _():
        acc_ref[...] = jnp.zeros_like(acc_ref)

    acc_ref[...] += jnp.dot(x_ref[...], w_ref[...],
                            preferred_element_type=jnp.float32)

    @pl.when(pl.program_id(1) == pl.num_programs(1) - 1)
    def _():
        y = (acc_ref[...] + b_ref[...].astype(jnp.float32)
             + res_ref[...].astype(jnp.float32))
        mean = jnp.mean(y, axis=-1, keepdims=True)
        var = jnp.mean(jnp.square(y - mean), axis=-1, keepdims=True)
        yn = (y - mean) * lax.rsqrt(var + eps)
        out = yn * g_ref[...].astype(jnp.float32) + bt_ref[...].astype(jnp.float32)
        o_ref[...] = out.astype(o_ref.dtype)


def linear_add_ln(x, w, b, res, gamma, beta, eps=1e-12):
    M, K = x.shape
    N = w.shape[1]
    broadcast_res = (res.shape[0] != M)        # (S, N) residual broadcast over batch
    tm = res.shape[0] if broadcast_res else _tile(M, 512, 8)
    tk = _tile(K, 512, 128)
    grid = (M // tm, K // tk)
    res_map = (lambda i, k: (0, 0)) if broadcast_res else (lambda i, k: (i, 0))
    return pl.pallas_call(
        functools.partial(_linear_res_ln_kernel, eps=eps),
        out_shape=jax.ShapeDtypeStruct((M, N), x.dtype),
        grid_spec=pltpu.PrefetchScalarGridSpec(
            num_scalar_prefetch=0,
            grid=grid,
            in_specs=[
                pl.BlockSpec((tm, tk), lambda i, k: (i, k)),
                pl.BlockSpec((tk, N), lambda i, k: (k, 0)),
                pl.BlockSpec((1, N), lambda i, k: (0, 0)),
                pl.BlockSpec((tm, N), res_map),
                pl.BlockSpec((1, N), lambda i, k: (0, 0)),
                pl.BlockSpec((1, N), lambda i, k: (0, 0)),
            ],
            out_specs=pl.BlockSpec((tm, N), lambda i, k: (i, 0)),
            scratch_shapes=[pltpu.VMEM((tm, N), jnp.float32)],
        ),
        compiler_params=pltpu.CompilerParams(
            dimension_semantics=("parallel", "arbitrary"),
            vmem_limit_bytes=_VMEM_LIMIT_BYTES,
        ),
    )(x, w, b.reshape(1, N), res, gamma.reshape(1, N), beta.reshape(1, N))


# ---------------------------------------------------------------------------
# Multi-head self-attention over a fused QKV buffer (B, S, 3*hidden).
# One batch element per grid step; heads split inside the kernel (no wrapper
# transposes); output written lane-dense over the full hidden width.
# TODO(synk): for long sequences, tile the KV axis flash-style with an
#             online-softmax accumulator instead of the full SxS score matrix.
# ---------------------------------------------------------------------------

def _attn_kernel(qkv_ref, o_ref, *, num_heads, head_dim, scale):
    hidden = num_heads * head_dim
    qkv = qkv_ref[0]                                   # (S, 3*hidden), native dtype
    parts = []
    for h in range(num_heads):
        q = qkv[:, h * head_dim:(h + 1) * head_dim]
        k = qkv[:, hidden + h * head_dim: hidden + (h + 1) * head_dim]
        v = qkv[:, 2 * hidden + h * head_dim: 2 * hidden + (h + 1) * head_dim]
        # q @ k^T on the MXU without materializing the transpose.
        s = lax.dot_general(q, k, (((1,), (1,)), ((), ())),
                            preferred_element_type=jnp.float32) * scale
        s = s - jnp.max(s, axis=-1, keepdims=True)
        p = jnp.exp(s)
        inv = pl.reciprocal(jnp.sum(p, axis=-1, keepdims=True), approx=True)
        ctx = jnp.dot(p.astype(qkv.dtype), v,
                      preferred_element_type=jnp.float32) * inv
        parts.append(ctx)
    o_ref[0] = jnp.concatenate(parts, axis=-1).astype(o_ref.dtype)


def attention(qkv, num_heads):
    B, S, three_h = qkv.shape
    hidden = three_h // 3
    head_dim = hidden // num_heads
    scale = 1.0 / math.sqrt(head_dim)
    return pl.pallas_call(
        functools.partial(_attn_kernel, num_heads=num_heads,
                          head_dim=head_dim, scale=scale),
        out_shape=jax.ShapeDtypeStruct((B, S, hidden), qkv.dtype),
        grid=(B,),
        in_specs=[pl.BlockSpec((1, S, three_h), lambda b: (b, 0, 0))],
        out_specs=pl.BlockSpec((1, S, hidden), lambda b: (b, 0, 0)),
        compiler_params=pltpu.CompilerParams(
            dimension_semantics=("parallel",),
            vmem_limit_bytes=_VMEM_LIMIT_BYTES,
        ),
    )(qkv)


# ---------------------------------------------------------------------------
# Fused pooler + classifier head (tiny: B rows).  Classifier output is padded
# to a lane-dense width (multiple of 128) and sliced back in JAX.
# ---------------------------------------------------------------------------

def _pool_cls_kernel(x_ref, pw_ref, pb_ref, cw_ref, cb_ref, o_ref):
    pooled = jnp.tanh(
        jnp.dot(x_ref[...], pw_ref[...], preferred_element_type=jnp.float32)
        + pb_ref[...].astype(jnp.float32))
    logits = (jnp.dot(pooled.astype(cw_ref.dtype), cw_ref[...],
                      preferred_element_type=jnp.float32)
              + cb_ref[...].astype(jnp.float32))
    o_ref[...] = logits.astype(o_ref.dtype)


def pooler_classifier(cls_tok, pool_w, pool_b, cls_w_pad, cls_b_pad):
    B, H = cls_tok.shape
    Npad = cls_w_pad.shape[1]
    return pl.pallas_call(
        _pool_cls_kernel,
        out_shape=jax.ShapeDtypeStruct((B, Npad), cls_tok.dtype),
        grid=(1,),
        in_specs=[
            pl.BlockSpec((B, H), lambda i: (0, 0)),
            pl.BlockSpec((H, H), lambda i: (0, 0)),
            pl.BlockSpec((1, H), lambda i: (0, 0)),
            pl.BlockSpec((H, Npad), lambda i: (0, 0)),
            pl.BlockSpec((1, Npad), lambda i: (0, 0)),
        ],
        out_specs=pl.BlockSpec((B, Npad), lambda i: (0, 0)),
        compiler_params=pltpu.CompilerParams(
            vmem_limit_bytes=_VMEM_LIMIT_BYTES),
    )(cls_tok, pool_w, pool_b.reshape(1, H), cls_w_pad, cls_b_pad.reshape(1, Npad))


# ---------------------------------------------------------------------------
# Parameter init (deterministic, synthetic — BERT-style N(0, 0.02))
# ---------------------------------------------------------------------------

def init_params(key, *, input_dim, hidden, intermediate, num_layers, nway, max_seq):
    keys = iter(jax.random.split(key, 8 + 10 * num_layers))

    def nrm(shape):
        return jax.random.normal(next(keys), shape, jnp.float32) * 0.02

    nway_pad = ((nway + 127) // 128) * 128
    cls_w = nrm((hidden, nway))
    cls_w_pad = jnp.zeros((hidden, nway_pad), jnp.float32).at[:, :nway].set(cls_w)

    p = {
        "conv_w": nrm((input_dim, hidden)),        # Conv1d(input_dim, hidden, k=1)
        "conv_b": jnp.zeros((hidden,), jnp.float32),
        "pos_emb": nrm((max_seq, hidden)),         # BertEmbeddings.position_embeddings
        "tok_emb": nrm((hidden,)),                 # token_type_embeddings row 0
        "emb_ln_g": jnp.ones((hidden,), jnp.float32),
        "emb_ln_b": jnp.zeros((hidden,), jnp.float32),
        "pool_w": nrm((hidden, hidden)),           # BertPooler.dense
        "pool_b": jnp.zeros((hidden,), jnp.float32),
        "cls_w_pad": cls_w_pad,                    # out_linear, lane-padded
        "cls_b_pad": jnp.zeros((nway_pad,), jnp.float32),
        "nway": nway,
        "layers": [],
    }
    for _ in range(num_layers):
        q_w, k_w, v_w = nrm((hidden, hidden)), nrm((hidden, hidden)), nrm((hidden, hidden))
        p["layers"].append({
            # fused QKV projection weight/bias
            "qkv_w": jnp.concatenate([q_w, k_w, v_w], axis=1),       # (hidden, 3*hidden)
            "qkv_b": jnp.zeros((3 * hidden,), jnp.float32),
            "ao_w": nrm((hidden, hidden)), "ao_b": jnp.zeros((hidden,), jnp.float32),
            "attn_ln_g": jnp.ones((hidden,), jnp.float32),
            "attn_ln_b": jnp.zeros((hidden,), jnp.float32),
            "i_w": nrm((hidden, intermediate)), "i_b": jnp.zeros((intermediate,), jnp.float32),
            "o_w": nrm((intermediate, hidden)), "o_b": jnp.zeros((hidden,), jnp.float32),
            "out_ln_g": jnp.ones((hidden,), jnp.float32),
            "out_ln_b": jnp.zeros((hidden,), jnp.float32),
        })
    return p


# ---------------------------------------------------------------------------
# Forward pass
# ---------------------------------------------------------------------------

def bert_classifier_forward(p, inputs_embeds, num_heads):
    B, S, D_in = inputs_embeds.shape
    hidden = p["conv_w"].shape[1]

    x2 = inputs_embeds.reshape(B * S, D_in)

    # Embeddings fused: LN(x @ conv_w + conv_b + pos_emb + tok_type_emb).
    # `extra` is (S, hidden) and broadcast over batch by the residual index_map.
    extra = p["pos_emb"][:S] + p["tok_emb"][None, :]
    h = linear_add_ln(x2, p["conv_w"], p["conv_b"], extra,
                      p["emb_ln_g"], p["emb_ln_b"])

    for l in p["layers"]:
        # Self-attention: one fused QKV matmul, head split inside the attention kernel.
        qkv = linear(h, l["qkv_w"], l["qkv_b"])                       # (B*S, 3*hidden)
        ctx = attention(qkv.reshape(B, S, 3 * hidden), num_heads)     # (B, S, hidden)
        ctx = ctx.reshape(B * S, hidden)
        # Attention output projection fused with residual add + LayerNorm.
        h = linear_add_ln(ctx, l["ao_w"], l["ao_b"], h,
                          l["attn_ln_g"], l["attn_ln_b"])

        # Feed-forward: gelu matmul, then output matmul fused with residual + LayerNorm.
        inter = linear(h, l["i_w"], l["i_b"], activation="gelu")
        h = linear_add_ln(inter, l["o_w"], l["o_b"], h,
                          l["out_ln_g"], l["out_ln_b"])

    # BertPooler (dense+tanh on first token) + classifier head (lane-padded, then sliced).
    cls_tok = h.reshape(B, S, hidden)[:, 0, :]                         # (B, hidden)
    logits_pad = pooler_classifier(cls_tok, p["pool_w"], p["pool_b"],
                                   p["cls_w_pad"], p["cls_b_pad"])
    return logits_pad[:, :p["nway"]]


# ---------------------------------------------------------------------------
# Main
# ---------------------------------------------------------------------------

if __name__ == "__main__":
    # Small shapes implied by the module's args:
    B, S = 2, 8
    input_dim, hidden = 16, 32
    num_heads, intermediate = 4, 64
    num_layers, nway = 2, 3

    key = jax.random.PRNGKey(0)
    pkey, xkey = jax.random.split(key)
    params = init_params(
        pkey,
        input_dim=input_dim,
        hidden=hidden,
        intermediate=intermediate,
        num_layers=num_layers,
        nway=nway,
        max_seq=S,
    )
    inputs_embeds = jax.random.normal(xkey, (B, S, input_dim), jnp.float32)

    out = bert_classifier_forward(params, inputs_embeds, num_heads)
    out = jax.block_until_ready(out)
    assert out.shape == (B, nway), out.shape
    assert jnp.all(jnp.isfinite(out))
    print("KERNEL_OK")
</pallas_src>

<mosaic_0001>
module attributes {stable_mosaic.version = 11 : i64} {
  func.func @_linear_res_ln_kernel(%arg0: i32, %arg1: i32, %arg2: memref<8x16xf32, #tpu.memory_space<vmem>>, %arg3: memref<16x32xf32, #tpu.memory_space<vmem>>, %arg4: memref<1x32xf32, #tpu.memory_space<vmem>>, %arg5: memref<8x32xf32, #tpu.memory_space<vmem>>, %arg6: memref<1x32xf32, #tpu.memory_space<vmem>>, %arg7: memref<1x32xf32, #tpu.memory_space<vmem>>, %arg8: memref<8x32xf32, #tpu.memory_space<vmem>>, %arg9: memref<8x32xf32, #tpu.memory_space<vmem>>) attributes {dimension_semantics = [#tpu.dimension_semantics<parallel>, #tpu.dimension_semantics<arbitrary>], iteration_bounds = array<i64: 2, 1>, scalar_prefetch = 0 : i64, scratch_operands = 1 : i64, tpu.core_type = #tpu.core_type<tc>, window_params = [{transform_indices = @transform_0, window_bounds = array<i64: 8, 16>}, {transform_indices = @transform_1, window_bounds = array<i64: 16, 32>}, {pipeline_mode = #tpu.pipeline_mode<synchronous>, transform_indices = @transform_2, window_bounds = array<i64: 1, 32>}, {pipeline_mode = #tpu.pipeline_mode<synchronous>, transform_indices = @transform_3, window_bounds = array<i64: 8, 32>}, {pipeline_mode = #tpu.pipeline_mode<synchronous>, transform_indices = @transform_4, window_bounds = array<i64: 1, 32>}, {pipeline_mode = #tpu.pipeline_mode<synchronous>, transform_indices = @transform_5, window_bounds = array<i64: 1, 32>}, {transform_indices = @transform_6, window_bounds = array<i64: 8, 32>}]} {
    %c0_i32 = arith.constant 0 : i32
    %0 = arith.cmpi eq, %arg1, %c0_i32 : i32
    %1 = arith.extui %0 : i1 to i32
    %c0_i32_0 = arith.constant 0 : i32
    %2 = arith.cmpi ne, %1, %c0_i32_0 : i32
    scf.if %2 {
      %cst_10 = arith.constant 0.000000e+00 : f32
      %12 = vector.broadcast %cst_10 : f32 to vector<8x32xf32>
      %c0_11 = arith.constant 0 : index
      %c0_12 = arith.constant 0 : index
      %13 = vector.load %arg9[%c0_11, %c0_12] : memref<8x32xf32, #tpu.memory_space<vmem>>, vector<8x32xf32>
      tpu.vector_store %arg9[%c0_11, %c0_12], %12 {strides = array<i32>} : memref<8x32xf32, #tpu.memory_space<vmem>>, vector<8x32xf32>,
    } else {
    }
    %c0 = arith.constant 0 : index
    %c0_1 = arith.constant 0 : index
    %3 = vector.load %arg9[%c0, %c0_1] : memref<8x32xf32, #tpu.memory_space<vmem>>, vector<8x32xf32>
    %c0_2 = arith.constant 0 : index
    %c0_3 = arith.constant 0 : index
    %4 = vector.load %arg2[%c0_2, %c0_3] : memref<8x16xf32, #tpu.memory_space<vmem>>, vector<8x16xf32>
    %c0_4 = arith.constant 0 : index
    %c0_5 = arith.constant 0 : index
    %5 = vector.load %arg3[%c0_4, %c0_5] : memref<16x32xf32, #tpu.memory_space<vmem>>, vector<16x32xf32>
    %cst = arith.constant dense<0.000000e+00> : vector<8x32xf32>
    %6 = tpu.matmul %4, %5, %cst {dimension_numbers = #tpu.dot_dimension_numbers<[1], [0], [0], [1], [0, 0, 1, 1], [], []>} : vector<8x16xf32>, vector<16x32xf32>, vector<8x32xf32> -> vector<8x32xf32>
    %7 = arith.addf %3, %6 : vector<8x32xf32>
    %c0_6 = arith.constant 0 : index
    %c0_7 = arith.constant 0 : index
    %8 = vector.load %arg9[%c0_6, %c0_7] : memref<8x32xf32, #tpu.memory_space<vmem>>, vector<8x32xf32>
    tpu.vector_store %arg9[%c0_6, %c0_7], %7 {strides = array<i32>} : memref<8x32xf32, #tpu.memory_space<vmem>>, vector<8x32xf32>,
    %c0_i32_8 = arith.constant 0 : i32
    %9 = arith.cmpi eq, %arg1, %c0_i32_8 : i32
    %10 = arith.extui %9 : i1 to i32
    %c0_i32_9 = arith.constant 0 : i32
    %11 = arith.cmpi ne, %10, %c0_i32_9 : i32
    scf.if %11 {
      %c0_10 = arith.constant 0 : index
      %c0_11 = arith.constant 0 : index
      %12 = vector.load %arg9[%c0_10, %c0_11] : memref<8x32xf32, #tpu.memory_space<vmem>>, vector<8x32xf32>
      %c0_12 = arith.constant 0 : index
      %c0_13 = arith.constant 0 : index
      %13 = vector.load %arg4[%c0_12, %c0_13] : memref<1x32xf32, #tpu.memory_space<vmem>>, vector<1x32xf32>
      %14 = vector.broadcast %13 : vector<1x32xf32> to vector<8x32xf32>
      %15 = arith.addf %12, %14 : vector<8x32xf32>
      %c0_14 = arith.constant 0 : index
      %c0_15 = arith.constant 0 : index
      %16 = vector.load %arg5[%c0_14, %c0_15] : memref<8x32xf32, #tpu.memory_space<vmem>>, vector<8x32xf32>
      %17 = arith.addf %15, %16 : vector<8x32xf32>
      %cst_16 = arith.constant dense<0.000000e+00> : vector<8xf32>
      %18 = vector.multi_reduction <add>, %17, %cst_16 [1] : vector<8x32xf32> to vector<8xf32>
      %19 = vector.shape_cast %18 : vector<8xf32> to vector<8x1xf32>
      %cst_17 = arith.constant 3.200000e+01 : f32
      %20 = vector.broadcast %cst_17 : f32 to vector<8x1xf32>
      %21 = arith.divf %19, %20 : vector<8x1xf32>
      %22 = vector.broadcast %21 : vector<8x1xf32> to vector<8x32xf32>
      %23 = arith.subf %17, %22 : vector<8x32xf32>
      %24 = arith.mulf %23, %23 : vector<8x32xf32>
      %cst_18 = arith.constant dense<0.000000e+00> : vector<8xf32>
      %25 = vector.multi_reduction <add>, %24, %cst_18 [1] : vector<8x32xf32> to vector<8xf32>
      %26 = vector.shape_cast %25 : vector<8xf32> to vector<8x1xf32>
      %cst_19 = arith.constant 3.200000e+01 : f32
      %27 = vector.broadcast %cst_19 : f32 to vector<8x1xf32>
      %28 = arith.divf %26, %27 : vector<8x1xf32>
      %29 = vector.broadcast %21 : vector<8x1xf32> to vector<8x32xf32>
      %30 = arith.subf %17, %29 : vector<8x32xf32>
      %cst_20 = arith.constant 9.99999996E-13 : f32
      %31 = vector.broadcast %cst_20 : f32 to vector<8x1xf32>
      %32 = arith.addf %28, %31 : vector<8x1xf32>
      %33 = math.rsqrt %32 : vector<8x1xf32>
      %34 = vector.broadcast %33 : vector<8x1xf32> to vector<8x32xf32>
      %35 = arith.mulf %30, %34 : vector<8x32xf32>
      %c0_21 = arith.constant 0 : index
      %c0_22 = arith.constant 0 : index
      %36 = vector.load %arg6[%c0_21, %c0_22] : memref<1x32xf32, #tpu.memory_space<vmem>>, vector<1x32xf32>
      %37 = vector.broadcast %36 : vector<1x32xf32> to vector<8x32xf32>
      %38 = arith.mulf %35, %37 : vector<8x32xf32>
      %c0_23 = arith.constant 0 : index
      %c0_24 = arith.constant 0 : index
      %39 = vector.load %arg7[%c0_23, %c0_24] : memref<1x32xf32, #tpu.memory_space<vmem>>, vector<1x32xf32>
      %40 = vector.broadcast %39 : vector<1x32xf32> to vector<8x32xf32>
      %41 = arith.addf %38, %40 : vector<8x32xf32>
      %c0_25 = arith.constant 0 : index
      %c0_26 = arith.constant 0 : index
      %42 = vector.load %arg8[%c0_25, %c0_26] : memref<8x32xf32, #tpu.memory_space<vmem>>, vector<8x32xf32>
      tpu.vector_store %arg8[%c0_25, %c0_26], %41 {strides = array<i32>} : memref<8x32xf32, #tpu.memory_space<vmem>>, vector<8x32xf32>,
    } else {
    }
    return
  }
  func.func @transform_0(%arg0: i32, %arg1: i32) -> (i32, i32) {
    %c0_i32 = arith.constant 0 : i32
    return %arg0, %arg1 : i32, i32
  }
  func.func @transform_1(%arg0: i32, %arg1: i32) -> (i32, i32) {
    %c0_i32 = arith.constant 0 : i32
    %c0_i32_0 = arith.constant 0 : i32
    return %arg1, %c0_i32 : i32, i32
  }
  func.func @transform_2(%arg0: i32, %arg1: i32) -> (i32, i32) {
    %c0_i32 = arith.constant 0 : i32
    %c0_i32_0 = arith.constant 0 : i32
    %c0_i32_1 = arith.constant 0 : i32
    return %c0_i32, %c0_i32_0 : i32, i32
  }
  func.func @transform_3(%arg0: i32, %arg1: i32) -> (i32, i32) {
    %c0_i32 = arith.constant 0 : i32
    %c0_i32_0 = arith.constant 0 : i32
    %c0_i32_1 = arith.constant 0 : i32
    return %c0_i32, %c0_i32_0 : i32, i32
  }
  func.func @transform_4(%arg0: i32, %arg1: i32) -> (i32, i32) {
    %c0_i32 = arith.constant 0 : i32
    %c0_i32_0 = arith.constant 0 : i32
    %c0_i32_1 = arith.constant 0 : i32
    return %c0_i32, %c0_i32_0 : i32, i32
  }
  func.func @transform_5(%arg0: i32, %arg1: i32) -> (i32, i32) {
    %c0_i32 = arith.constant 0 : i32
    %c0_i32_0 = arith.constant 0 : i32
    %c0_i32_1 = arith.constant 0 : i32
    return %c0_i32, %c0_i32_0 : i32, i32
  }
  func.func @transform_6(%arg0: i32, %arg1: i32) -> (i32, i32) {
    %c0_i32 = arith.constant 0 : i32
    %c0_i32_0 = arith.constant 0 : i32
    return %arg0, %c0_i32 : i32, i32
  }
}

</mosaic_0001>

<llo_original>
// kernel: tpu_custom_call.1
$region0: #{tpu_custom_call.1}
  #allocation0 [shape = 'u32[]', space=smem, size = 0x4, offset = 0x4, fixed_abs, tag = 'smem constant byte address 0x4 - core index']
  #allocation1 [shape = 'u32[144,128]{1,0:T(1,128)}', space=vmem, size = 0x12000, scoped, tag = 'internal scratch']
  #allocation2 [shape = 'f32[8,32]{1,0:T(8,128)}', space=vmem, size = 0x1000, scoped, tag = 'scratch operand']
  %s0 = inlined_call_operand.hbm [shape: f32[16,16], index: 0, kind: input, shape index: {}]
  %s1 = inlined_call_operand.hbm [shape: f32[16,32], index: 1, kind: input, shape index: {}]
  %s2 = inlined_call_operand.vmem [shape: f32[1,32], index: 2, kind: input, shape index: {}]
  %s3 = inlined_call_operand.hbm [shape: f32[8,32], index: 3, kind: input, shape index: {}]
  %s4 = inlined_call_operand.vmem [shape: f32[1,32], index: 4, kind: input, shape index: {}]
  %s5 = inlined_call_operand.vmem [shape: f32[1,32], index: 5, kind: input, shape index: {}]
  %s6 = inlined_call_operand.hbm [shape: f32[16,32], index: 6, kind: output, shape index: {}]
  %s7 = sld [smem:[#allocation0]]
  $region77: #{tpu_custom_call.1} parent=0
    _
  %s9 = ssub.s32 1, %s7
  %s10 = scalar_select 0, %s9, %s7
  $region1: #{tpu_custom_call.1} parent=0
    #allocation3 [shape = 'u8[8192]{0}', space=vmem, size = 0x2000, scoped, tag = 'input window, operand 0']
    #allocation4 [shape = 's32[2]{0}', space=sflag, size = 0x8, scoped, tag = 'scoped memory for tpu_custom_call.1']
    #allocation5 [shape = 's32[2]{0}', space=sflag, size = 0x8, scoped, tag = 'scoped memory for tpu_custom_call.1']
    #allocation6 [shape = 'u8[8192]{0}', space=vmem, size = 0x2000, scoped, tag = 'input window, operand 1, single buffered']
    #allocation7 [shape = 's32[1]{0}', space=sflag, size = 0x4, scoped, tag = 'scoped memory for tpu_custom_call.1']
    #allocation8 [shape = 'u8[4096]{0}', space=vmem, size = 0x1000, scoped, tag = 'input window, operand 3, single buffered']
    #allocation9 [shape = 'u8[8192]{0}', space=vmem, size = 0x2000, scoped, tag = 'output window, operand 0']
    %11 = vsyncpa [#allocation4], 0
    %s12 = scalar_lea.sflag [#allocation4], 1
    %13 = vsyncpa %s12, 0
    %14 = vsyncpa [#allocation7], 0
    %15 = vsyncpa [#allocation5], 0
    %s16 = scalar_lea.sflag [#allocation5], 1
    %17 = vsyncpa %s16, 0
    loop: start=0, step=1, limit=4
    $region2: #{tpu_custom_call.1} parent=1 // loop_pre_header
      _
    $region3: #{tpu_custom_call.1} parent=1 // loop_header
      %s19 = sphi 0, %s23
      %p20 = scmp.ge.s32.totalorder %s19, 4
      %s26 = sphi 0, %s38
      %s27 = sphi 0, %s34
      %s28 = sphi 0, %s26
      %s29 = sphi 0, %s27
      %s30 = sphi 0, %s28
      %s31 = sphi 0, %s29
      %s43 = sphi 0, %s45
      %s46 = sphi 0, %s43
      %s47 = sphi 0, %s46
      %s63 = sphi 0, %s47
      %s69 = sphi 0, %s71
      %s72 = sphi 0, %s69
      %s73 = sphi 0, %s72
      %s89 = sphi 0, %s73
      %s93 = sphi 0, %s93
      %s95 = sphi 0, %s93
      %s96 = sphi 0, %s95
      %s110 = sphi 0, %s96
      %s114 = sphi 0, %s114
      %s116 = sphi 0, %s114
      %s117 = sphi 0, %s116
      %s131 = sphi 0, %s117
      %s135 = sphi 0, %s135
      %s137 = sphi 0, %s135
      %s138 = sphi 0, %s137
      %s152 = sphi 0, %s138
      %s156 = sphi 0, %s156
      %s158 = sphi 0, %s156
      %s159 = sphi 0, %s158
      %s173 = sphi 0, %s159
      %s179 = sphi 0, %s181
      %s182 = sphi 0, %s179
      %s183 = sphi 0, %s182
      %s199 = sphi 0, %s183
    $region4: #{tpu_custom_call.1} parent=1 // loop_header_branch
      %22 = sbr.rel (%p20) target = $region8
    $region5: #{tpu_custom_call.1} parent=1 // loop_body
      %s24 = ssub.s32 %s19, 1
      %s25 = ssub.s32 %s19, 2
      %s32 = sadd.s32 1, %s27
      %p33 = scmp.ge.s32.totalorder %s32, 1
      %s34 = scalar_select %p33, 0, %s32
      %s35 = sadd.s32 1, %s26
      %s36 = scalar_select %p33, %s35, %s26
      %p37 = scmp.ge.s32.totalorder %s36, 2
      %s38 = scalar_select %p37, 0, %s36
      %s39 = ssub.s32 %s26, %s38
      %s40 = ssub.s32 %s27, %s34
      %s41 = sor.u32 %s39, %s40
      %p42 = scmp.eq.s32.totalorder %s41, 0
      %s44 = sadd.s32 %s43, 1
      %s45 = scalar_select %p42, %s43, %s44
      %p48 = pneg %p42
      %p49 = scmp.eq.s32.totalorder %s19, 1
      %p50 = por %p48, %p49
      %p51 = scmp.ne.s32.totalorder %s43, %s46
      %p52 = scmp.eq.s32.totalorder %s19, 0
      %p53 = por %p51, %p52
      %p54 = scmp.ne.s32.totalorder %s43, %s46
      %p55 = scmp.eq.s32.totalorder %s24, 1
      %p56 = por %p54, %p55
      %p57 = scmp.ne.s32.totalorder %s46, %s47
      %p58 = scmp.eq.s32.totalorder %s24, 0
      %p59 = por %p57, %p58
      %p60 = scmp.ne.s32.totalorder %s46, %s47
      %p61 = scmp.eq.s32.totalorder %s25, 1
      %p62 = por %p60, %p61
      %p64 = scmp.ne.s32.totalorder %s47, %s63
      %p65 = scmp.eq.s32.totalorder %s25, 0
      %p66 = por %p64, %p65
      %s67 = ssub.s32 %s27, %s34
      %p68 = scmp.eq.s32.totalorder %s67, 0
      %s70 = sadd.s32 %s69, 1
      %s71 = scalar_select %p68, %s69, %s70
      %p74 = pneg %p68
      %p75 = scmp.eq.s32.totalorder %s19, 1
      %p76 = por %p74, %p75
      %p77 = scmp.ne.s32.totalorder %s69, %s72
      %p78 = scmp.eq.s32.totalorder %s19, 0
      %p79 = por %p77, %p78
      %p80 = scmp.ne.s32.totalorder %s69, %s72
      %p81 = scmp.eq.s32.totalorder %s24, 1
      %p82 = por %p80, %p81
      %p83 = scmp.ne.s32.totalorder %s72, %s73
      %p84 = scmp.eq.s32.totalorder %s24, 0
      %p85 = por %p83, %p84
      %p86 = scmp.ne.s32.totalorder %s72, %s73
      %p87 = scmp.eq.s32.totalorder %s25, 1
      %p88 = por %p86, %p87
      %p90 = scmp.ne.s32.totalorder %s73, %s89
      %p91 = scmp.eq.s32.totalorder %s25, 0
      %p92 = por %p90, %p91
      %s94 = sadd.s32 %s93, 1
      %p97 = scmp.eq.s32.totalorder %s19, 1
      %p98 = scmp.ne.s32.totalorder %s93, %s95
      %p99 = scmp.eq.s32.totalorder %s19, 0
      %p100 = por %p98, %p99
      %p101 = scmp.ne.s32.totalorder %s93, %s95
      %p102 = scmp.eq.s32.totalorder %s24, 1
      %p103 = por %p101, %p102
      %p104 = scmp.ne.s32.totalorder %s95, %s96
      %p105 = scmp.eq.s32.totalorder %s24, 0
      %p106 = por %p104, %p105
      %p107 = scmp.ne.s32.totalorder %s95, %s96
      %p108 = scmp.eq.s32.totalorder %s25, 1
      %p109 = por %p107, %p108
      %p111 = scmp.ne.s32.totalorder %s96, %s110
      %p112 = scmp.eq.s32.totalorder %s25, 0
      %p113 = por %p111, %p112
      %s115 = sadd.s32 %s114, 1
      %p118 = scmp.eq.s32.totalorder %s19, 1
      %p119 = scmp.ne.s32.totalorder %s114, %s116
      %p120 = scmp.eq.s32.totalorder %s19, 0
      %p121 = por %p119, %p120
      %p122 = scmp.ne.s32.totalorder %s114, %s116
      %p123 = scmp.eq.s32.totalorder %s24, 1
      %p124 = por %p122, %p123
      %p125 = scmp.ne.s32.totalorder %s116, %s117
      %p126 = scmp.eq.s32.totalorder %s24, 0
      %p127 = por %p125, %p126
      %p128 = scmp.ne.s32.totalorder %s116, %s117
      %p129 = scmp.eq.s32.totalorder %s25, 1
      %p130 = por %p128, %p129
      %p132 = scmp.ne.s32.totalorder %s117, %s131
      %p133 = scmp.eq.s32.totalorder %s25, 0
      %p134 = por %p132, %p133
      %s136 = sadd.s32 %s135, 1
      %p139 = scmp.eq.s32.totalorder %s19, 1
      %p140 = scmp.ne.s32.totalorder %s135, %s137
      %p141 = scmp.eq.s32.totalorder %s19, 0
      %p142 = por %p140, %p141
      %p143 = scmp.ne.s32.totalorder %s135, %s137
      %p144 = scmp.eq.s32.totalorder %s24, 1
      %p145 = por %p143, %p144
      %p146 = scmp.ne.s32.totalorder %s137, %s138
      %p147 = scmp.eq.s32.totalorder %s24, 0
      %p148 = por %p146, %p147
      %p149 = scmp.ne.s32.totalorder %s137, %s138
      %p150 = scmp.eq.s32.totalorder %s25, 1
      %p151 = por %p149, %p150
      %p153 = scmp.ne.s32.totalorder %s138, %s152
      %p154 = scmp.eq.s32.totalorder %s25, 0
      %p155 = por %p153, %p154
      %s157 = sadd.s32 %s156, 1
      %p160 = scmp.eq.s32.totalorder %s19, 1
      %p161 = scmp.ne.s32.totalorder %s156, %s158
      %p162 = scmp.eq.s32.totalorder %s19, 0
      %p163 = por %p161, %p162
      %p164 = scmp.ne.s32.totalorder %s156, %s158
      %p165 = scmp.eq.s32.totalorder %s24, 1
      %p166 = por %p164, %p165
      %p167 = scmp.ne.s32.totalorder %s158, %s159
      %p168 = scmp.eq.s32.totalorder %s24, 0
      %p169 = por %p167, %p168
      %p170 = scmp.ne.s32.totalorder %s158, %s159
      %p171 = scmp.eq.s32.totalorder %s25, 1
      %p172 = por %p170, %p171
      %p174 = scmp.ne.s32.totalorder %s159, %s173
      %p175 = scmp.eq.s32.totalorder %s25, 0
      %p176 = por %p174, %p175
      %s177 = ssub.s32 %s26, %s38
      %p178 = scmp.eq.s32.totalorder %s177, 0
      %s180 = sadd.s32 %s179, 1
      %s181 = scalar_select %p178, %s179, %s180
      %p184 = pneg %p178
      %p185 = scmp.eq.s32.totalorder %s19, 1
      %p186 = por %p184, %p185
      %p187 = scmp.ne.s32.totalorder %s179, %s182
      %p188 = scmp.eq.s32.totalorder %s19, 0
      %p189 = por %p187, %p188
      %p190 = scmp.ne.s32.totalorder %s179, %s182
      %p191 = scmp.eq.s32.totalorder %s24, 1
      %p192 = por %p190, %p191
      %p193 = scmp.ne.s32.totalorder %s182, %s183
      %p194 = scmp.eq.s32.totalorder %s24, 0
      %p195 = por %p193, %p194
      %p196 = scmp.ne.s32.totalorder %s182, %s183
      %p197 = scmp.eq.s32.totalorder %s25, 1
      %p198 = por %p196, %p197
      %p200 = scmp.ne.s32.totalorder %s183, %s199
      %p201 = scmp.eq.s32.totalorder %s25, 0
      %p202 = por %p200, %p201
      %p203 = scmp.le.s32.totalorder 1, %s19
      %p204 = scmp.lt.s32.totalorder %s19, 3
      %p205 = pnand %p203, %p204
      %p206 = pneg %p205
      // Predicated region
      $region9: #{tpu_custom_call.1} parent=5 // pred_check
        _
      $region10: #{tpu_custom_call.1} parent=5 // pred_check_branch
        %208 = sbr.rel (%p205) target = $region12
      $region11: #{tpu_custom_call.1} parent=5 // pred_region
        %s209 = ssub.s32 %s19, 1
        // Predicated region
        $region13: #{tpu_custom_call.1} parent=11 // pred_check
          %p210 = pneg %p85
        $region14: #{tpu_custom_call.1} parent=11 // pred_check_branch
          %212 = sbr.rel (%p210) target = $region16
        $region15: #{tpu_custom_call.1} parent=11 // pred_region
          %s213 = smul.u32 2, %s29
          %s215 = ssub.s32 256, 256
          %216 = vsyncadd [#allocation7], %s215
          %s217 = smul.addr %s213, 128
          %s218 = scalar_lea.hbm %s1, %s217
          %s219 = sshll.u32 [#allocation6], 4
          %s220 = int_to_ptr.vmem [resolvable:$true] %s219
          %225 = dma.hbm_to_vmem [thread:$0]  %s218, 256, %s220, [#allocation7], 128, 128, 8
        $region16: #{tpu_custom_call.1} parent=11 // pred_fallthru
          _
        // Predicated region
        $region17: #{tpu_custom_call.1} parent=11 // pred_check
          %p226 = pneg %p106
        $region18: #{tpu_custom_call.1} parent=11 // pred_check_branch
          %228 = sbr.rel (%p226) target = $region20
        $region19: #{tpu_custom_call.1} parent=11 // pred_region
          _
        $region20: #{tpu_custom_call.1} parent=11 // pred_fallthru
          _
        // Predicated region
        $region21: #{tpu_custom_call.1} parent=11 // pred_check
          %p229 = pneg %p127
        $region22: #{tpu_custom_call.1} parent=11 // pred_check_branch
          %231 = sbr.rel (%p229) target = $region24
        $region23: #{tpu_custom_call.1} parent=11 // pred_region
          %s233 = ssub.s32 128, 128
          %234 = vsyncadd [#allocation7], %s233
          %s236 = sshll.u32 [#allocation8], 4
          %s237 = int_to_ptr.vmem [resolvable:$true] %s236
          %239 = dma.hbm_to_vmem [thread:$0]  %s3, 128, %s237, [#allocation7]
        $region24: #{tpu_custom_call.1} parent=11 // pred_fallthru
          _
        // Predicated region
        $region25: #{tpu_custom_call.1} parent=11 // pred_check
          %p240 = pneg %p148
        $region26: #{tpu_custom_call.1} parent=11 // pred_check_branch
          %242 = sbr.rel (%p240) target = $region28
        $region27: #{tpu_custom_call.1} parent=11 // pred_region
          _
        $region28: #{tpu_custom_call.1} parent=11 // pred_fallthru
          _
        // Predicated region
        $region29: #{tpu_custom_call.1} parent=11 // pred_check
          %p243 = pneg %p169
        $region30: #{tpu_custom_call.1} parent=11 // pred_check_branch
          %245 = sbr.rel (%p243) target = $region32
        $region31: #{tpu_custom_call.1} parent=11 // pred_region
          _
        $region32: #{tpu_custom_call.1} parent=11 // pred_fallthru
          _
      $region12: #{tpu_custom_call.1} parent=5 // pred_fallthru
        _
      %p246 = scmp.lt.s32.totalorder %s19, 2
      // Predicated region
      $region33: #{tpu_custom_call.1} parent=5 // pred_check
        %p247 = pneg %p246
      $region34: #{tpu_custom_call.1} parent=5 // pred_check_branch
        %249 = sbr.rel (%p247) target = $region36
      $region35: #{tpu_custom_call.1} parent=5 // pred_region
        // Predicated region
        $region37: #{tpu_custom_call.1} parent=35 // pred_check
          %p250 = pneg %p53
        $region38: #{tpu_custom_call.1} parent=35 // pred_check_branch
          %252 = sbr.rel (%p250) target = $region40
        $region39: #{tpu_custom_call.1} parent=35 // pred_region
          %s253 = sand.u32 %s43, 1
          %s254 = scalar_lea.sflag [#allocation4], %s253
          %s255 = sand.u32 %s43, 1
          %s256 = smul.addr %s255, 8
          %s257 = scalar_lea.vmem [#allocation3], %s256
          %s259 = ssub.s32 128, 128
          %260 = vsyncadd %s254, %s259
          %s261 = sadd.s32 %s27, %s26
          %s262 = smul.addr %s261, 128
          %s263 = scalar_lea.hbm %s0, %s262
          %s265 = sshll.u32 %s257, 4
          %s266 = int_to_ptr.vmem [resolvable:$true] %s265
          %268 = dma.hbm_to_vmem [thread:$0]  %s263, 128, %s266, %s254
        $region40: #{tpu_custom_call.1} parent=35 // pred_fallthru
          _
      $region36: #{tpu_custom_call.1} parent=5 // pred_fallthru
        _
      %p269 = scmp.le.s32.totalorder 1, %s19
      %p270 = scmp.lt.s32.totalorder %s19, 3
      %p271 = pnand %p269, %p270
      %p272 = pneg %p271
      // Predicated region
      $region41: #{tpu_custom_call.1} parent=5 // pred_check
        _
      $region42: #{tpu_custom_call.1} parent=5 // pred_check_branch
        %274 = sbr.rel (%p271) target = $region44
      $region43: #{tpu_custom_call.1} parent=5 // pred_region
        %s275 = ssub.s32 %s19, 1
        %s276 = sand.u32 %s46, 1
        %s277 = scalar_lea.sflag [#allocation4], %s276
        %s278 = sand.u32 %s46, 1
        %s279 = smul.addr %s278, 8
        %s280 = scalar_lea.vmem [#allocation3], %s279
        // Predicated region
        $region45: #{tpu_custom_call.1} parent=43 // pred_check
          %p281 = pneg %p59
        $region46: #{tpu_custom_call.1} parent=43 // pred_check_branch
          %283 = sbr.rel (%p281) target = $region48
        $region47: #{tpu_custom_call.1} parent=43 // pred_region
          %284 = dma.done %s277, 128
        $region48: #{tpu_custom_call.1} parent=43 // pred_fallthru
          _
        // Predicated region
        $region49: #{tpu_custom_call.1} parent=43 // pred_check
          %p285 = pneg %p85
        $region50: #{tpu_custom_call.1} parent=43 // pred_check_branch
          %287 = sbr.rel (%p285) target = $region52
        $region51: #{tpu_custom_call.1} parent=43 // pred_region
          %288 = dma.done [#allocation7], 256
        $region52: #{tpu_custom_call.1} parent=43 // pred_fallthru
          _
        // Predicated region
        $region53: #{tpu_custom_call.1} parent=43 // pred_check
          %p289 = pneg %p127
        $region54: #{tpu_custom_call.1} parent=43 // pred_check_branch
          %291 = sbr.rel (%p289) target = $region56
        $region55: #{tpu_custom_call.1} parent=43 // pred_region
          %292 = dma.done [#allocation7], 128
        $region56: #{tpu_custom_call.1} parent=43 // pred_fallthru
          _
        %s293 = sand.u32 %s46, 1
        %s294 = scalar_lea.sflag [#allocation4], %s293
        %s295 = sand.u32 %s46, 1
        %s296 = smul.addr %s295, 8
        %s297 = scalar_lea.vmem [#allocation3], %s296
        %p298 = pneg %p59
        %p299 = pneg %p56
        %p300 = pneg %p85
        %p301 = pneg %p82
        %p302 = pneg %p106
        %p303 = pneg %p103
        %p304 = pneg %p127
        %p305 = pneg %p124
        %p306 = pneg %p148
        %p307 = pneg %p145
        %p308 = pneg %p169
        %p309 = pneg %p166
        %p310 = pneg %p195
        %p311 = pneg %p192
        %s312 = sand.u32 %s182, 1
        %s313 = scalar_lea.sflag [#allocation5], %s312
        %s314 = sand.u32 %s182, 1
        %s315 = smul.addr %s314, 8
        %s316 = scalar_lea.vmem [#allocation9], %s315
        %s317 = smul.u32 2, %s29
        %p318 = scmp.eq.s32.totalorder %s29, 0
        // Predicated region
        $region57: #{tpu_custom_call.1} parent=43 // pred_check
          %p319 = pneg %p318
        $region58: #{tpu_custom_call.1} parent=43 // pred_check_branch
          %321 = sbr.rel (%p319) target = $region60
        $region59: #{tpu_custom_call.1} parent=43 // pred_region
          %vm322 = vcmask 261120
          %323 = vst.msk [vmem:[#allocation2] sm:$0xff] %vm322, 0.0
        $region60: #{tpu_custom_call.1} parent=43 // pred_fallthru
          _
        %v324 = vld [vmem:[#allocation2] sm:$0xff]
        %v325 = vld [vmem:[%s280] sm:$0xff]
        %v326 = vld [vmem:[#allocation6] sm:$0xff]
        %v327 = vld [vmem:[#allocation6 + $0x8] sm:$0xff]
        %vm328 = vcmask 130048
        %v330 = vsel %vm328, %v325, 0
        %332 = vmatprep.subr.mxu0 0.0
        %333 = vmatpush1.msra.mxu0 0.0
        %334 = vmatprep.subr.mxu0 0.0
        %335 = vmatpush1.msra.mxu0 0.0
        %336 = vmatprep.subr.mxu0 0.0
        %337 = vmatpush1.msra.mxu0 0.0
        %338 = vmatprep.subr.mxu0 0.0
        %339 = vmatpush1.msra.mxu0 0.0
        %340 = vmatprep.subr.mxu0 0.0
        %341 = vmatpush1.msra.mxu0 0.0
        %342 = vmatprep.subr.mxu0 0.0
        %343 = vmatpush1.msra.mxu0 0.0
        %344 = vmatprep.subr.mxu0 0.0
        %345 = vmatpush1.msra.mxu0 0.0
        %346 = vmatprep.subr.mxu0 0.0
        %347 = vmatpush1.msra.mxu0 0.0
        %348 = vmatprep.subr.mxu0 0.0
        %349 = vmatpush1.msra.mxu0 0.0
        %350 = vmatprep.subr.mxu0 0.0
        %351 = vmatpush1.msra.mxu0 0.0
        %352 = vmatprep.subr.mxu0 0.0
        %353 = vmatpush1.msra.mxu0 0.0
        %354 = vmatprep.subr.mxu0 0.0
        %355 = vmatpush1.msra.mxu0 0.0
        %356 = vmatprep.subr.mxu0 0.0
        %357 = vmatpush1.msra.mxu0 0.0
        %358 = vmatprep.subr.mxu0 0.0
        %359 = vmatpush1.msra.mxu0 0.0
        %360 = vmatprep.subr.mxu0 0.0
        %361 = vmatpush1.msra.mxu0 %v327
        %362 = vmatprep.subr.mxu0 0.0
        %363 = vmatpush1.msra.mxu0 %v326
        %364 = vmatprep.subr.mxu0 0.0
        %365 = vmatpush2.msra.mxu0 0.0
        %366 = vmatprep.subr.mxu0 0.0
        %367 = vmatpush2.msra.mxu0 0.0
        %368 = vmatprep.subr.mxu0 0.0
        %369 = vmatpush2.msra.mxu0 0.0
        %370 = vmatprep.subr.mxu0 0.0
        %371 = vmatpush2.msra.mxu0 0.0
        %372 = vmatprep.subr.mxu0 0.0
        %373 = vmatpush2.msra.mxu0 0.0
        %374 = vmatprep.subr.mxu0 0.0
        %375 = vmatpush2.msra.mxu0 0.0
        %376 = vmatprep.subr.mxu0 0.0
        %377 = vmatpush2.msra.mxu0 0.0
        %378 = vmatprep.subr.mxu0 0.0
        %379 = vmatpush2.msra.mxu0 0.0
        %380 = vmatprep.subr.mxu0 0.0
        %381 = vmatpush2.msra.mxu0 0.0
        %382 = vmatprep.subr.mxu0 0.0
        %383 = vmatpush2.msra.mxu0 0.0
        %384 = vmatprep.subr.mxu0 0.0
        %385 = vmatpush2.msra.mxu0 0.0
        %386 = vmatprep.subr.mxu0 0.0
        %387 = vmatpush2.msra.mxu0 0.0
        %388 = vmatprep.subr.mxu0 0.0
        %389 = vmatpush2.msra.mxu0 0.0
        %390 = vmatprep.subr.mxu0 0.0
        %391 = vmatpush2.msra.mxu0 0.0
        %392 = vmatprep.subr.mxu0 0.0
        %393 = vmatpush2.msra.mxu0 0.0
        %394 = vmatprep.subr.mxu0 0.0
        %395 = vmatpush2.msra.mxu0 0.0
        %396 = vmatprep.mubr.f32.mxu0 0.0
        %397 = vmatmul.mubr.f32.gmra.mxu0 %v330
        %v398 = vpop.f32.mrf.mxu0
        %v399 = vadd.f32 0.0, %v398
        %v400 = vpop.f32.mrf.mxu0
        %401 = vdwg.mxu0
        %v402 = vadd.f32 %v324, %v399
        %vm403 = vcmask 261120
        %404 = vst.msk [vmem:[#allocation2] sm:$0xff] %vm403, %v402
        // Predicated region
        $region61: #{tpu_custom_call.1} parent=43 // pred_check
          %p405 = pneg %p318
        $region62: #{tpu_custom_call.1} parent=43 // pred_check_branch
          %407 = sbr.rel (%p405) target = $region64
        $region63: #{tpu_custom_call.1} parent=43 // pred_region
          %v408 = vld [vmem:[#allocation2] sm:$0xff]
          %v409 = vld [vmem:[%s2] sm:$0x1]
          %v411 = vlaneseq
          %v412 = vshrl.u32 %v411, 7
          %v413 = vsub.s32 0, %v412
          %v414 = vrot.slane %v409, %v413
          %v416 = vadd.f32 %v408, %v414
          %v417 = vld [vmem:[#allocation8] sm:$0xff]
          %v418 = vadd.f32 %v416, %v417
          %v419 = vsel %vm403, %v418, 0.0
          %420 = vadd.xlane.f32.xlu0 %v419
          %v421 = vpop.xlane.xlu0 %420
          %v422 = vrcp.pop 32.0
          %v423 = vmul.f32 %v421, %v422
          %v424 = vsub.f32 %v418, %v423
          %v425 = vmul.f32 %v424, %v424
          %v426 = vsel %vm403, %v425, 0.0
          %427 = vadd.xlane.f32.xlu0 %v426
          %v428 = vpop.xlane.xlu0 %427
          %v429 = vmul.f32 %v428, %v422
          %v430 = vadd.f32 %v429, 1e-12
          %v431 = vrsqrt.pop %v430
          %v432 = vmul.f32 %v424, %v431
          %v433 = vld [vmem:[%s4] sm:$0x1]
          %v435 = vlaneseq
          %v436 = vshrl.u32 %v435, 7
          %v437 = vsub.s32 0, %v436
          %v438 = vrot.slane %v433, %v437
          %v440 = vmul.f32 %v432, %v438
          %v441 = vld [vmem:[%s5] sm:$0x1]
          %v443 = vlaneseq
          %v444 = vshrl.u32 %v443, 7
          %v445 = vsub.s32 0, %v444
          %v446 = vrot.slane %v441, %v445
          %v448 = vadd.f32 %v440, %v446
          %449 = vst.msk [vmem:[%s316] sm:$0xff] %vm403, %v448
        $region64: #{tpu_custom_call.1} parent=43 // pred_fallthru
          _
        %s450 = sand.u32 %s182, 1
        %s451 = scalar_lea.sflag [#allocation5], %s450
        %s452 = sand.u32 %s182, 1
        %s453 = smul.addr %s452, 8
        %s454 = scalar_lea.vmem [#allocation9], %s453
        // Predicated region
        $region65: #{tpu_custom_call.1} parent=43 // pred_check
          %p455 = pneg %p192
        $region66: #{tpu_custom_call.1} parent=43 // pred_check_branch
          %457 = sbr.rel (%p455) target = $region68
        $region67: #{tpu_custom_call.1} parent=43 // pred_region
          %s459 = ssub.s32 128, 128
          %460 = vsyncadd %s451, %s459
          %s461 = smul.addr %s28, 128
          %s462 = scalar_lea.hbm %s6, %s461
          %s464 = sshll.u32 %s454, 4
          %s465 = int_to_ptr.vmem [resolvable:$true] %s464
          %467 = dma.vmem_to_hbm [thread:$0]  %s465, 128, %s462, %s451
        $region68: #{tpu_custom_call.1} parent=43 // pred_fallthru
          _
      $region44: #{tpu_custom_call.1} parent=5 // pred_fallthru
        _
      %p468 = scmp.le.s32.totalorder 2, %s19
      // Predicated region
      $region69: #{tpu_custom_call.1} parent=5 // pred_check
        %p469 = pneg %p468
      $region70: #{tpu_custom_call.1} parent=5 // pred_check_branch
        %471 = sbr.rel (%p469) target = $region72
      $region71: #{tpu_custom_call.1} parent=5 // pred_region
        %s472 = ssub.s32 %s19, 2
        // Predicated region
        $region73: #{tpu_custom_call.1} parent=71 // pred_check
          %p473 = pneg %p198
        $region74: #{tpu_custom_call.1} parent=71 // pred_check_branch
          %475 = sbr.rel (%p473) target = $region76
        $region75: #{tpu_custom_call.1} parent=71 // pred_region
          %s476 = sand.u32 %s183, 1
          %s477 = scalar_lea.sflag [#allocation5], %s476
          %s478 = sand.u32 %s183, 1
          %s479 = smul.addr %s478, 8
          %s480 = scalar_lea.vmem [#allocation9], %s479
          %481 = dma.done %s477, 128
        $region76: #{tpu_custom_call.1} parent=71 // pred_fallthru
          _
      $region72: #{tpu_custom_call.1} parent=5 // pred_fallthru
        _
    $region6: #{tpu_custom_call.1} parent=1 // loop_footer
      %s23 = sadd.s32 1, %s19
    $region7: #{tpu_custom_call.1} parent=1 // loop_footer_branch
      %18 = sbr.rel target = $region3
    $region8: #{tpu_custom_call.1} parent=1 // loop_exit
      _
    %482 = vsyncpa [#allocation4], 1
    %s483 = scalar_lea.sflag [#allocation4], 1
    %484 = vsyncpa %s483, 1
    %485 = vsyncpa [#allocation7], 1
    %486 = vsyncpa [#allocation5], 1
    %s487 = scalar_lea.sflag [#allocation5], 1
    %488 = vsyncpa %s487, 1

</llo_original>
